<compile_context>
chip_gen: v6e
topology: v6e:2x2x1
jax: 0.10.0
libtpu: 0.0.40
codegen_flags: <defaults>
</compile_context>

<pallas_src>
import functools

import jax
import jax.numpy as jnp
from jax.experimental import pallas as pl
from jax.experimental.pallas import tpu as pltpu


# ---------------------------------------------------------------------------
# Kernels
# ---------------------------------------------------------------------------

def _sortpool_rows_kernel(x_ref, o_ref, *, k):
    """Row-tiled path: block (tm, 2K); lanes [0,K)=ch 2p, [K,2K)=ch 2p+1."""
    x = x_ref[...]
    a = x[:, :k]
    b = x[:, k:]
    diff = jnp.maximum(a - b, 0).astype(x.dtype)   # relu(x1 - x2), exact PyTorch form
    o_ref[:, :k] = a - diff                        # min(x1, x2)
    o_ref[:, k:] = b + diff                        # max(x1, x2)


def _sortpool_pair_kernel(x_ref, o_ref):
    """Lane-tiled path: block (tm, 2, tk) over the contiguous (M, 2, K) view."""
    a = x_ref[:, 0, :]
    b = x_ref[:, 1, :]
    diff = jnp.maximum(a - b, 0).astype(a.dtype)
    o_ref[:, 0, :] = a - diff
    o_ref[:, 1, :] = b + diff


# ---------------------------------------------------------------------------
# Wrapper
# ---------------------------------------------------------------------------

def _default_block_budget_bytes():
    """Chip-aware per-block byte budget for this memory-bound kernel."""
    try:
        info = pltpu.get_tpu_info()
        vmem = int(getattr(info, "vmem_capacity_bytes", 0) or 0)
    except Exception:
        vmem = 0
    if vmem and vmem <= (96 << 20):
        # v7x-class part (64 MiB VMEM/TC, ~3.2 TB/s HBM): bigger blocks amortize
        # the ~0.35 us/step overhead; 4 x 8 MiB live buffers still fit easily.
        return 8 << 20
    # v5e / v6e (128 MiB VMEM): ~4 MiB tiles already sit at the roofline knee.
    return 4 << 20


def sort_pool(x, *, block_budget_bytes=None, donate=True):
    """Channel-wise sort pooling. x: (N, C, H, W), C even. Returns same shape."""
    N, C, H, W = x.shape
    assert C % 2 == 0, "SortPool requires an even channel count"
    P = C // 2
    K = H * W
    K2 = 2 * K
    M = N * P
    dsize = jnp.dtype(x.dtype).itemsize
    sub = 8 * max(1, 4 // dsize)          # sublane multiple: 8 (f32) / 16 (bf16)

    budget = int(block_budget_bytes) if block_budget_bytes else _default_block_budget_bytes()
    total_bytes = M * K2 * dsize
    vmem_floor = 16 << 20
    alias = {0: 0} if donate else {}
    row_bytes = K2 * dsize

    if sub * row_bytes <= budget:
        # ---- Path A: row-tiled slab (M, 2K) -------------------------------
        xf = x.reshape(M, K2)              # contiguous, zero-copy
        tm = max(sub, (budget // row_bytes) // sub * sub)
        if total_bytes > (4 << 20) and M > sub:
            # Guarantee >= 2 row blocks so both v7x TensorCores stream and the
            # read/write DMAs of consecutive blocks overlap.
            half = (-(-M // 2) + sub - 1) // sub * sub
            tm = min(tm, half)
        tm = min(tm, M)                    # full-extent block is always legal
        block_bytes = tm * row_bytes
        vmem_limit = int(max(4 * block_bytes + (4 << 20), vmem_floor))

        out = pl.pallas_call(
            functools.partial(_sortpool_rows_kernel, k=K),
            out_shape=jax.ShapeDtypeStruct((M, K2), x.dtype),
            grid=(pl.cdiv(M, tm),),
            in_specs=[pl.BlockSpec((tm, K2), lambda i: (i, 0))],
            out_specs=pl.BlockSpec((tm, K2), lambda i: (i, 0)),
            input_output_aliases=alias,
            compiler_params=pltpu.CompilerParams(
                dimension_semantics=("parallel",),
                vmem_limit_bytes=vmem_limit,
            ),
        )(xf)
        return out.reshape(N, C, H, W)

    # ---- Path B: huge rows -> tile the lane axis via the (M, 2, K) view ----
    xr = x.reshape(M, 2, K)                # contiguous, zero-copy
    tm = min(sub, M)                       # leading dim: unconstrained by (8,128)
    if K >= 128:
        tk_full = (K // 128) * 128
        tk = max(128, (budget // (tm * 2 * dsize)) // 128 * 128)
        tk = min(tk, tk_full)              # ragged last lane block is masked
    else:
        tk = K
    block_bytes = tm * 2 * tk * dsize
    vmem_limit = int(max(4 * block_bytes + (4 << 20), vmem_floor))

    out = pl.pallas_call(
        _sortpool_pair_kernel,
        out_shape=jax.ShapeDtypeStruct((M, 2, K), x.dtype),
        grid=(pl.cdiv(M, tm), pl.cdiv(K, tk)),
        in_specs=[pl.BlockSpec((tm, 2, tk), lambda i, j: (i, 0, j))],
        out_specs=pl.BlockSpec((tm, 2, tk), lambda i, j: (i, 0, j)),
        input_output_aliases=alias,
        compiler_params=pltpu.CompilerParams(
            dimension_semantics=("parallel", "parallel"),
            vmem_limit_bytes=vmem_limit,
        ),
    )(xr)
    return out.reshape(N, C, H, W)


# ---------------------------------------------------------------------------
# Reference + tests
# ---------------------------------------------------------------------------

def _reference(x):
    # Pure-JAX reference mirroring the PyTorch SortPool forward.
    N, C, H, W = x.shape
    xr = x.reshape(N, C // 2, 2, H, W)
    x1 = xr[:, :, 0:1]
    x2 = xr[:, :, 1:2]
    diff = jnp.maximum(x1 - x2, 0.0)
    return jnp.concatenate([x1 - diff, x2 + diff], axis=2).reshape(N, C, H, W)


if __name__ == "__main__":
    key = jax.random.PRNGKey(0)
    k1, k2, k3, k4 = jax.random.split(key, 4)

    # 1) Primary small test (shape consistent with the module's activations).
    x1 = jax.random.normal(k1, (2, 4, 16, 16), dtype=jnp.float32)
    ref1 = _reference(x1)                       # compute ref before (donation-safe)
    out1 = jax.block_until_ready(sort_pool(x1))
    assert out1.shape == x1.shape
    assert jnp.allclose(out1, ref1, atol=1e-6), "mismatch (path A, single block)"

    # 2) Path A with multiple row blocks and a ragged last block (M=12, tm=8).
    x2 = jax.random.normal(k2, (2, 12, 16, 16), dtype=jnp.float32)
    ref2 = _reference(x2)
    out2 = jax.block_until_ready(sort_pool(x2, block_budget_bytes=16 * 1024))
    assert jnp.allclose(out2, ref2, atol=1e-6), "mismatch (path A, multi-block)"

    # 3) Path A with H*W not a multiple of 128 (masked lane split — correctness).
    x3 = jax.random.normal(k3, (2, 4, 10, 10), dtype=jnp.float32)
    ref3 = _reference(x3)
    out3 = jax.block_until_ready(sort_pool(x3))
    assert jnp.allclose(out3, ref3, atol=1e-6), "mismatch (path A, unaligned K)"

    # 4) Path B (lane-tiled fallback for huge H*W), forced via a tiny budget,
    #    including a ragged lane boundary (K=324, tk=128).
    x4 = jax.random.normal(k4, (1, 6, 18, 18), dtype=jnp.float32)
    ref4 = _reference(x4)
    out4 = jax.block_until_ready(sort_pool(x4, block_budget_bytes=4096))
    assert jnp.allclose(out4, ref4, atol=1e-6), "mismatch (path B, lane-tiled)"

    print("KERNEL_OK")
</pallas_src>

<mosaic_0001>
module attributes {stable_mosaic.version = 11 : i64} {
  func.func @_sortpool_rows_kernel(%arg0: i32, %arg1: memref<4x512xf32, #tpu.memory_space<vmem>>, %arg2: memref<4x512xf32, #tpu.memory_space<vmem>>) attributes {dimension_semantics = [#tpu.dimension_semantics<parallel>], iteration_bounds = array<i64: 1>, scalar_prefetch = 0 : i64, scratch_operands = 0 : i64, tpu.core_type = #tpu.core_type<tc>, window_params = [{transform_indices = @transform_0, window_bounds = array<i64: 4, 512>}, {transform_indices = @transform_1, window_bounds = array<i64: 4, 512>}]} {
    %c0 = arith.constant 0 : index
    %c0_0 = arith.constant 0 : index
    %0 = vector.load %arg1[%c0, %c0_0] : memref<4x512xf32, #tpu.memory_space<vmem>>, vector<4x512xf32>
    %1 = vector.extract_strided_slice %0 {offsets = [0, 0], sizes = [4, 256], strides = [1, 1]} : vector<4x512xf32> to vector<4x256xf32>
    %2 = vector.extract_strided_slice %0 {offsets = [0, 256], sizes = [4, 256], strides = [1, 1]} : vector<4x512xf32> to vector<4x256xf32>
    %3 = arith.subf %1, %2 : vector<4x256xf32>
    %cst = arith.constant 0.000000e+00 : f32
    %4 = vector.broadcast %cst : f32 to vector<4x256xf32>
    %5 = arith.maximumf %3, %4 : vector<4x256xf32>
    %6 = arith.subf %1, %5 : vector<4x256xf32>
    %c0_1 = arith.constant 0 : index
    %c0_2 = arith.constant 0 : index
    %7 = vector.load %arg2[%c0_1, %c0_2] : memref<4x512xf32, #tpu.memory_space<vmem>>, vector<4x256xf32>
    tpu.vector_store %arg2[%c0_1, %c0_2], %6 {strides = array<i32>} : memref<4x512xf32, #tpu.memory_space<vmem>>, vector<4x256xf32>,
    %8 = arith.addf %2, %5 : vector<4x256xf32>
    %c0_3 = arith.constant 0 : index
    %c256 = arith.constant 256 : index
    %9 = vector.load %arg2[%c0_3, %c256] : memref<4x512xf32, #tpu.memory_space<vmem>>, vector<4x256xf32>
    tpu.vector_store %arg2[%c0_3, %c256], %8 {strides = array<i32>} : memref<4x512xf32, #tpu.memory_space<vmem>>, vector<4x256xf32>,
    return
  }
  func.func @transform_0(%arg0: i32) -> (i32, i32) {
    %c0_i32 = arith.constant 0 : i32
    %c0_i32_0 = arith.constant 0 : i32
    return %arg0, %c0_i32 : i32, i32
  }
  func.func @transform_1(%arg0: i32) -> (i32, i32) {
    %c0_i32 = arith.constant 0 : i32
    %c0_i32_0 = arith.constant 0 : i32
    return %arg0, %c0_i32 : i32, i32
  }
}

</mosaic_0001>

<llo_original>
// kernel: tpu_custom_call.1
$region0: #{tpu_custom_call.1}
  #allocation0 [shape = 'u32[]', space=smem, size = 0x4, offset = 0x4, fixed_abs, tag = 'smem constant byte address 0x4 - core index']
  #allocation1 [shape = 'u32[144,128]{1,0:T(1,128)}', space=vmem, size = 0x12000, scoped, tag = 'internal scratch']
  %s0 = inlined_call_operand.hbm [shape: f32[4,512], index: 0, kind: input, shape index: {}, may-alias: {0,1}]
  %s1 = inlined_call_operand.hbm [shape: f32[4,512], index: 1, kind: output, shape index: {}, may-alias: {0,1}]
  %s2 = sld [smem:[#allocation0]]
  $region18: #{tpu_custom_call.1} parent=0
    _
  %s4 = ssub.s32 1, %s2
  %s5 = scalar_select 0, %s4, %s2
  $region1: #{tpu_custom_call.1} parent=0
    #allocation2 [shape = 'u8[8192]{0}', space=vmem, size = 0x2000, scoped, tag = 'input window, operand 0, single buffered']
    #allocation3 [shape = 's32[1]{0}', space=sflag, size = 0x4, scoped, tag = 'scoped memory for tpu_custom_call.1']
    #allocation4 [shape = 's32[1]{0}', space=sflag, size = 0x4, scoped, tag = 'scoped memory for tpu_custom_call.1']
    #allocation5 [shape = 'u8[8192]{0}', space=vmem, size = 0x2000, scoped, tag = 'output window, operand 0, single buffered']
    %6 = vsyncpa [#allocation3], 0
    %7 = vsyncpa [#allocation4], 0
    // Predicated region
    $region2: #{tpu_custom_call.1} parent=1 // pred_check
      _
    $region3: #{tpu_custom_call.1} parent=1 // pred_check_branch
      %9 = sbr.rel (0) target = $region5
    $region4: #{tpu_custom_call.1} parent=1 // pred_region
      %s11 = ssub.s32 256, 256
      %12 = vsyncadd [#allocation3], %s11
      %s14 = sshll.u32 [#allocation2], 4
      %s15 = int_to_ptr.vmem [resolvable:$true] %s14
      %17 = dma.hbm_to_vmem [thread:$0]  %s0, 256, %s15, [#allocation3]
    $region5: #{tpu_custom_call.1} parent=1 // pred_fallthru
      _
    // Predicated region
    $region6: #{tpu_custom_call.1} parent=1 // pred_check
      _
    $region7: #{tpu_custom_call.1} parent=1 // pred_check_branch
      %19 = sbr.rel (0) target = $region9
    $region8: #{tpu_custom_call.1} parent=1 // pred_region
      %20 = dma.done [#allocation3], 256
    $region9: #{tpu_custom_call.1} parent=1 // pred_fallthru
      _
    %v21 = vld [vmem:[#allocation2] sm:$0xff]
    %v22 = vld [vmem:[#allocation2 + $0x8] sm:$0xff]
    %v23 = vsub.f32 %v21, %v22
    %v24 = vmax.f32 %v23, 0.0
    %v25 = vsub.f32 %v21, %v24
    %26 = vst [vmem:[#allocation5] sm:$0xff] %v25
    %v27 = vadd.f32 %v22, %v24
    %28 = vst [vmem:[#allocation5 + $0x8] sm:$0xff] %v27
    // Predicated region
    $region10: #{tpu_custom_call.1} parent=1 // pred_check
      _
    $region11: #{tpu_custom_call.1} parent=1 // pred_check_branch
      %30 = sbr.rel (0) target = $region13
    $region12: #{tpu_custom_call.1} parent=1 // pred_region
      %s32 = ssub.s32 256, 256
      %33 = vsyncadd [#allocation4], %s32
      %s35 = sshll.u32 [#allocation5], 4
      %s36 = int_to_ptr.vmem [resolvable:$true] %s35
      %38 = dma.vmem_to_hbm [thread:$0]  %s36, 256, %s1, [#allocation4]
    $region13: #{tpu_custom_call.1} parent=1 // pred_fallthru
      _
    // Predicated region
    $region14: #{tpu_custom_call.1} parent=1 // pred_check
      _
    $region15: #{tpu_custom_call.1} parent=1 // pred_check_branch
      %40 = sbr.rel (0) target = $region17
    $region16: #{tpu_custom_call.1} parent=1 // pred_region
      %41 = dma.done [#allocation4], 256
    $region17: #{tpu_custom_call.1} parent=1 // pred_fallthru
      _
    %42 = vsyncpa [#allocation3], 1
    %43 = vsyncpa [#allocation4], 1

</llo_original>
